<compile_context>
chip_gen: v6e
topology: v6e:2x2x1
jax: 0.10.0
libtpu: 0.0.40
codegen_flags: <defaults>
</compile_context>

<pallas_src>
import numpy as np
import jax
import jax.numpy as jnp
from jax.experimental import pallas as pl
from jax.experimental.pallas import tpu as pltpu


# ----------------------------- configuration --------------------------------
INPUT_DIM = 16          # n
LATENT_DIM = 4          # m
HIDDEN = 32             # single hidden layer width
BATCH = 8               # batch size (multiple of 8 -> sublane-aligned splits)
N_TERMS = 1 + LATENT_DIM + (LATENT_DIM * (LATENT_DIM + 1)) // 2  # 15
OUT_WIDTH = 128         # lane-dense output slab (payload = 2n + 3m = 44)


# --------------------------- parameter slab layout ---------------------------
def _align8(r):
    return (r + 7) // 8 * 8


def _make_layout(n, m, h):
    """Row-block layout of every parameter inside one (rows, 32) f32 slab."""
    entries = [
        ("we1", (n, h)),          # encoder L1 weight  (in, out)
        ("be1", (1, h)),          # encoder L1 bias
        ("we2", (h, m)),          # encoder L2 weight
        ("be2", (1, m)),          # encoder L2 bias
        ("xi0", (1, m)),          # Xi constant-term row
        ("xi_lin", (m, m)),       # Xi linear-term rows
        ("r_tile", (m, m * m)),   # z -> tiled z_i   (0/1 expansion)
        ("r_rep", (m, m * m)),    # z -> repeated z_j (0/1 expansion)
        ("xi_quad", (m * m, m)),  # Xi quadratic rows (i>j duplicates zeroed)
        ("wd1", (m, h)),          # decoder L1 weight
        ("bd1", (1, h)),          # decoder L1 bias
        ("wd2", (h, n)),          # decoder L2 weight
        ("bd2", (1, n)),          # decoder L2 bias
    ]
    width = max(shape[1] for _, shape in entries)
    layout, off = {}, 0
    for name, shape in entries:
        layout[name] = (off, shape)
        off = _align8(off + shape[0])
    return layout, off, width


LAYOUT, SLAB_ROWS, SLAB_COLS = _make_layout(INPUT_DIM, LATENT_DIM, HIDDEN)


# ------------------------------- kernel -------------------------------------
def autosindy_kernel(xs_ref, p_ref, out_ref):
    f32 = jnp.float32
    n, m = INPUT_DIM, LATENT_DIM
    B = out_ref.shape[0]

    def P(name):  # static slice of the packed parameter slab (no DMA, just vld)
        off, (r, c) = LAYOUT[name]
        return p_ref[off:off + r, 0:c]

    # ---- encoder layer 1: value + derivative streams stacked on sublanes ----
    xs = xs_ref[...]                                                  # (2B, n)
    p1 = jnp.dot(xs, P("we1"), preferred_element_type=f32)            # (2B, h)
    pre1 = p1[:B] + P("be1")
    h1 = jnp.maximum(pre1, 0.0)
    dh1 = jnp.where(pre1 > 0, p1[B:], 0.0)                            # fused mask

    # ---- encoder layer 2 (linear) -------------------------------------------
    p2 = jnp.dot(jnp.concatenate([h1, dh1], axis=0), P("we2"),
                 preferred_element_type=f32)                          # (2B, m)
    z = p2[:B] + P("be2")
    zdot = p2[B:]

    # ---- SINDy library via pre-folded expansion matmuls ----------------------
    # theta_quad[:, i*m+j] = z_i * z_j ; Xi_quad zeroes the i>j duplicates and
    # carries the canonical i<=j coefficients; xi0 carries the constant term.
    zt = jnp.dot(z, P("r_tile"), preferred_element_type=f32)          # (B, m*m)
    zr = jnp.dot(z, P("r_rep"), preferred_element_type=f32)           # (B, m*m)
    theta_quad = zt * zr
    f_z = (P("xi0")
           + jnp.dot(z, P("xi_lin"), preferred_element_type=f32)
           + jnp.dot(theta_quad, P("xi_quad"), preferred_element_type=f32))

    # ---- decoder layer 1 (shared pre-activations for value/derivative) ------
    q1 = jnp.dot(jnp.concatenate([z, f_z], axis=0), P("wd1"),
                 preferred_element_type=f32)                          # (2B, h)
    pre_d1 = q1[:B] + P("bd1")
    d1 = jnp.maximum(pre_d1, 0.0)
    dd1 = jnp.where(pre_d1 > 0, q1[B:], 0.0)

    # ---- decoder layer 2 -----------------------------------------------------
    q2 = jnp.dot(jnp.concatenate([d1, dd1], axis=0), P("wd2"),
                 preferred_element_type=f32)                          # (2B, n)
    x_recon = q2[:B] + P("bd2")
    f_x = q2[B:]

    # ---- single lane-dense (B, 128) output slab ------------------------------
    pad = jnp.zeros((B, OUT_WIDTH - (2 * n + 3 * m)), f32)
    out_ref[...] = jnp.concatenate([x_recon, f_x, z, zdot, f_z, pad], axis=1)


# --------------------------- parameter preparation ---------------------------
def prepare_params(params):
    """One-time glue: transpose weights, split/fold Xi, pack into one slab."""
    n, m, h = INPUT_DIM, LATENT_DIM, HIDDEN
    xiT = np.asarray(params["xi"], np.float32).T                 # (n_terms, m)

    xi0 = xiT[0:1, :]                                            # constant term
    xi_lin = xiT[1:1 + m, :]                                     # linear terms
    xi_quad = np.zeros((m * m, m), np.float32)                   # quadratic terms
    t = 1 + m
    for i in range(m):
        for j in range(i, m):
            xi_quad[i * m + j, :] = xiT[t, :]                    # i>j rows stay 0
            t += 1

    r_tile = np.zeros((m, m * m), np.float32)                    # z @ r_tile -> z_i
    r_rep = np.zeros((m, m * m), np.float32)                     # z @ r_rep  -> z_j
    for i in range(m):
        for j in range(m):
            r_tile[i, i * m + j] = 1.0
            r_rep[j, i * m + j] = 1.0

    mats = {
        "we1": np.asarray(params["we1"], np.float32).T,          # (n, h)
        "be1": np.asarray(params["be1"], np.float32)[None, :],
        "we2": np.asarray(params["we2"], np.float32).T,          # (h, m)
        "be2": np.asarray(params["be2"], np.float32)[None, :],
        "xi0": xi0, "xi_lin": xi_lin,
        "r_tile": r_tile, "r_rep": r_rep, "xi_quad": xi_quad,
        "wd1": np.asarray(params["wd1"], np.float32).T,          # (m, h)
        "bd1": np.asarray(params["bd1"], np.float32)[None, :],
        "wd2": np.asarray(params["wd2"], np.float32).T,          # (h, n)
        "bd2": np.asarray(params["bd2"], np.float32)[None, :],
    }

    slab = np.zeros((SLAB_ROWS, SLAB_COLS), np.float32)
    for name, (off, (r, c)) in LAYOUT.items():
        assert mats[name].shape == (r, c), (name, mats[name].shape, (r, c))
        slab[off:off + r, 0:c] = mats[name]

    return {"slab": jnp.asarray(slab), "xi": params["xi"]}


# ------------------------------- wrapper -------------------------------------
def autosindy_forward(x, x_dot, pp):
    """Returns (X_recon, Z, Z_dot, f_Z, f_X, Xi) exactly like the torch module."""
    B, n = x.shape
    m = LATENT_DIM
    xs = jnp.concatenate([x, x_dot], axis=0)      # stack once outside the kernel

    vmem = pl.BlockSpec(memory_space=pltpu.MemorySpace.VMEM)
    slab = pl.pallas_call(
        autosindy_kernel,
        out_shape=jax.ShapeDtypeStruct((B, OUT_WIDTH), jnp.float32),
        in_specs=[vmem, vmem],
        out_specs=vmem,
    )(xs, pp["slab"])

    x_recon = slab[:, 0:n]
    f_x = slab[:, n:2 * n]
    z = slab[:, 2 * n:2 * n + m]
    z_dot = slab[:, 2 * n + m:2 * n + 2 * m]
    f_z = slab[:, 2 * n + 2 * m:2 * n + 3 * m]
    return x_recon, z, z_dot, f_z, f_x, pp["xi"]


# --------------------------- pure-JAX reference ------------------------------
def _theta_ref(z):
    m = z.shape[1]
    cols = [jnp.ones((z.shape[0], 1), jnp.float32), z]
    for i in range(m):
        for j in range(i, m):
            cols.append(z[:, i:i + 1] * z[:, j:j + 1])
    return jnp.concatenate(cols, axis=-1)


def autosindy_ref(x, x_dot, p):
    enc = [(p["we1"], p["be1"]), (p["we2"], p["be2"])]
    dec = [(p["wd1"], p["bd1"]), (p["wd2"], p["bd2"])]

    def translate(X, Xd, layers):
        l, dl = X, Xd
        for i, (w, b) in enumerate(layers):
            l = l @ w.T + b
            dl = dl @ w.T
            if i < len(layers) - 1:
                dl = (l > 0).astype(jnp.float32) * dl
                l = jnp.maximum(l, 0.0)
        return l, dl

    z, z_dot = translate(x, x_dot, enc)
    f_z = _theta_ref(z) @ p["xi"].T
    x_recon, _ = translate(z, jnp.zeros_like(f_z), dec)
    _, f_x = translate(z, f_z, dec)
    return x_recon, z, z_dot, f_z, f_x, p["xi"]


# --------------------------------- main --------------------------------------
def _init_params(key):
    ks = jax.random.split(key, 9)

    def u(k, shape, fan_in):
        bound = 1.0 / jnp.sqrt(fan_in)
        return jax.random.uniform(k, shape, jnp.float32, -bound, bound)

    n, m, h = INPUT_DIM, LATENT_DIM, HIDDEN
    return {
        "we1": u(ks[0], (h, n), n), "be1": u(ks[1], (h,), n),
        "we2": u(ks[2], (m, h), h), "be2": u(ks[3], (m,), h),
        "wd1": u(ks[4], (h, m), m), "bd1": u(ks[5], (h,), m),
        "wd2": u(ks[6], (n, h), h), "bd2": u(ks[7], (n,), h),
        "xi":  u(ks[8], (m, N_TERMS), N_TERMS),
    }


if __name__ == "__main__":
    key = jax.random.PRNGKey(0)
    k1, k2, k3 = jax.random.split(key, 3)
    params = _init_params(k1)
    prepared = prepare_params(params)           # one-time weight packing (glue)
    x = jax.random.normal(k2, (BATCH, INPUT_DIM), jnp.float32)
    x_dot = jax.random.normal(k3, (BATCH, INPUT_DIM), jnp.float32)

    outs = autosindy_forward(x, x_dot, prepared)
    outs = jax.block_until_ready(outs)

    refs = autosindy_ref(x, x_dot, params)
    names = ("X_recon", "Z", "Z_dot", "f_Z", "f_X", "Xi")
    for name, o, r in zip(names, outs, refs):
        assert o.shape == r.shape, (name, o.shape, r.shape)
        assert jnp.allclose(o, r, atol=1e-5, rtol=1e-5), name

    print("KERNEL_OK")
</pallas_src>

<mosaic_0001>
module attributes {stable_mosaic.version = 11 : i64} {
  func.func @autosindy_kernel(%arg0: memref<16x16xf32, #tpu.memory_space<vmem>>, %arg1: memref<168x32xf32, #tpu.memory_space<vmem>>, %arg2: memref<8x128xf32, #tpu.memory_space<vmem>>) attributes {dimension_semantics = [], scalar_prefetch = 0 : i64, scratch_operands = 0 : i64, tpu.core_type = #tpu.core_type<tc>} {
    %c0 = arith.constant 0 : index
    %c0_0 = arith.constant 0 : index
    %0 = vector.load %arg0[%c0, %c0_0] : memref<16x16xf32, #tpu.memory_space<vmem>>, vector<16x16xf32>
    %c0_1 = arith.constant 0 : index
    %c0_2 = arith.constant 0 : index
    %1 = vector.load %arg1[%c0_1, %c0_2] : memref<168x32xf32, #tpu.memory_space<vmem>>, vector<16x32xf32>
    %cst = arith.constant dense<0.000000e+00> : vector<16x32xf32>
    %2 = tpu.matmul %0, %1, %cst {dimension_numbers = #tpu.dot_dimension_numbers<[1], [0], [0], [1], [0, 0, 1, 1], [], []>} : vector<16x16xf32>, vector<16x32xf32>, vector<16x32xf32> -> vector<16x32xf32>
    %3 = vector.extract_strided_slice %2 {offsets = [0, 0], sizes = [8, 32], strides = [1, 1]} : vector<16x32xf32> to vector<8x32xf32>
    %c16 = arith.constant 16 : index
    %c0_3 = arith.constant 0 : index
    %4 = vector.load %arg1[%c16, %c0_3] : memref<168x32xf32, #tpu.memory_space<vmem>>, vector<1x32xf32>
    %5 = vector.broadcast %4 : vector<1x32xf32> to vector<8x32xf32>
    %6 = arith.addf %3, %5 : vector<8x32xf32>
    %cst_4 = arith.constant 0.000000e+00 : f32
    %7 = vector.broadcast %cst_4 : f32 to vector<8x32xf32>
    %8 = arith.maximumf %6, %7 : vector<8x32xf32>
    %cst_5 = arith.constant 0.000000e+00 : f32
    %9 = vector.broadcast %cst_5 : f32 to vector<8x32xf32>
    %10 = arith.cmpf ogt, %6, %9 : vector<8x32xf32>
    %11 = vector.extract_strided_slice %2 {offsets = [8, 0], sizes = [8, 32], strides = [1, 1]} : vector<16x32xf32> to vector<8x32xf32>
    %cst_6 = arith.constant 0.000000e+00 : f32
    %12 = vector.broadcast %cst_6 : f32 to vector<8x32xf32>
    %13 = arith.select %10, %11, %12 : vector<8x32xi1>, vector<8x32xf32>
    %14 = tpu.concatenate %8, %13 in 0 : vector<8x32xf32>, vector<8x32xf32> -> vector<16x32xf32>
    %c24 = arith.constant 24 : index
    %c0_7 = arith.constant 0 : index
    %15 = vector.load %arg1[%c24, %c0_7] : memref<168x32xf32, #tpu.memory_space<vmem>>, vector<32x4xf32>
    %cst_8 = arith.constant dense<0.000000e+00> : vector<16x4xf32>
    %16 = tpu.matmul %14, %15, %cst_8 {dimension_numbers = #tpu.dot_dimension_numbers<[1], [0], [0], [1], [0, 0, 1, 1], [], []>} : vector<16x32xf32>, vector<32x4xf32>, vector<16x4xf32> -> vector<16x4xf32>
    %17 = vector.extract_strided_slice %16 {offsets = [0, 0], sizes = [8, 4], strides = [1, 1]} : vector<16x4xf32> to vector<8x4xf32>
    %c56 = arith.constant 56 : index
    %c0_9 = arith.constant 0 : index
    %18 = vector.load %arg1[%c56, %c0_9] : memref<168x32xf32, #tpu.memory_space<vmem>>, vector<1x4xf32>
    %19 = vector.broadcast %18 : vector<1x4xf32> to vector<8x4xf32>
    %20 = arith.addf %17, %19 : vector<8x4xf32>
    %21 = vector.extract_strided_slice %16 {offsets = [8, 0], sizes = [8, 4], strides = [1, 1]} : vector<16x4xf32> to vector<8x4xf32>
    %c80 = arith.constant 80 : index
    %c0_10 = arith.constant 0 : index
    %22 = vector.load %arg1[%c80, %c0_10] : memref<168x32xf32, #tpu.memory_space<vmem>>, vector<4x16xf32>
    %cst_11 = arith.constant dense<0.000000e+00> : vector<8x16xf32>
    %23 = tpu.matmul %20, %22, %cst_11 {dimension_numbers = #tpu.dot_dimension_numbers<[1], [0], [0], [1], [0, 0, 1, 1], [], []>} : vector<8x4xf32>, vector<4x16xf32>, vector<8x16xf32> -> vector<8x16xf32>
    %c88 = arith.constant 88 : index
    %c0_12 = arith.constant 0 : index
    %24 = vector.load %arg1[%c88, %c0_12] : memref<168x32xf32, #tpu.memory_space<vmem>>, vector<4x16xf32>
    %cst_13 = arith.constant dense<0.000000e+00> : vector<8x16xf32>
    %25 = tpu.matmul %20, %24, %cst_13 {dimension_numbers = #tpu.dot_dimension_numbers<[1], [0], [0], [1], [0, 0, 1, 1], [], []>} : vector<8x4xf32>, vector<4x16xf32>, vector<8x16xf32> -> vector<8x16xf32>
    %26 = arith.mulf %23, %25 : vector<8x16xf32>
    %c64 = arith.constant 64 : index
    %c0_14 = arith.constant 0 : index
    %27 = vector.load %arg1[%c64, %c0_14] : memref<168x32xf32, #tpu.memory_space<vmem>>, vector<1x4xf32>
    %c72 = arith.constant 72 : index
    %c0_15 = arith.constant 0 : index
    %28 = vector.load %arg1[%c72, %c0_15] : memref<168x32xf32, #tpu.memory_space<vmem>>, vector<4x4xf32>
    %cst_16 = arith.constant dense<0.000000e+00> : vector<8x4xf32>
    %29 = tpu.matmul %20, %28, %cst_16 {dimension_numbers = #tpu.dot_dimension_numbers<[1], [0], [0], [1], [0, 0, 1, 1], [], []>} : vector<8x4xf32>, vector<4x4xf32>, vector<8x4xf32> -> vector<8x4xf32>
    %30 = vector.broadcast %27 : vector<1x4xf32> to vector<8x4xf32>
    %31 = arith.addf %30, %29 : vector<8x4xf32>
    %c96 = arith.constant 96 : index
    %c0_17 = arith.constant 0 : index
    %32 = vector.load %arg1[%c96, %c0_17] : memref<168x32xf32, #tpu.memory_space<vmem>>, vector<16x4xf32>
    %cst_18 = arith.constant dense<0.000000e+00> : vector<8x4xf32>
    %33 = tpu.matmul %26, %32, %cst_18 {dimension_numbers = #tpu.dot_dimension_numbers<[1], [0], [0], [1], [0, 0, 1, 1], [], []>} : vector<8x16xf32>, vector<16x4xf32>, vector<8x4xf32> -> vector<8x4xf32>
    %34 = arith.addf %31, %33 : vector<8x4xf32>
    %35 = tpu.concatenate %20, %34 in 0 : vector<8x4xf32>, vector<8x4xf32> -> vector<16x4xf32>
    %c112 = arith.constant 112 : index
    %c0_19 = arith.constant 0 : index
    %36 = vector.load %arg1[%c112, %c0_19] : memref<168x32xf32, #tpu.memory_space<vmem>>, vector<4x32xf32>
    %cst_20 = arith.constant dense<0.000000e+00> : vector<16x32xf32>
    %37 = tpu.matmul %35, %36, %cst_20 {dimension_numbers = #tpu.dot_dimension_numbers<[1], [0], [0], [1], [0, 0, 1, 1], [], []>} : vector<16x4xf32>, vector<4x32xf32>, vector<16x32xf32> -> vector<16x32xf32>
    %38 = vector.extract_strided_slice %37 {offsets = [0, 0], sizes = [8, 32], strides = [1, 1]} : vector<16x32xf32> to vector<8x32xf32>
    %c120 = arith.constant 120 : index
    %c0_21 = arith.constant 0 : index
    %39 = vector.load %arg1[%c120, %c0_21] : memref<168x32xf32, #tpu.memory_space<vmem>>, vector<1x32xf32>
    %40 = vector.broadcast %39 : vector<1x32xf32> to vector<8x32xf32>
    %41 = arith.addf %38, %40 : vector<8x32xf32>
    %cst_22 = arith.constant 0.000000e+00 : f32
    %42 = vector.broadcast %cst_22 : f32 to vector<8x32xf32>
    %43 = arith.maximumf %41, %42 : vector<8x32xf32>
    %cst_23 = arith.constant 0.000000e+00 : f32
    %44 = vector.broadcast %cst_23 : f32 to vector<8x32xf32>
    %45 = arith.cmpf ogt, %41, %44 : vector<8x32xf32>
    %46 = vector.extract_strided_slice %37 {offsets = [8, 0], sizes = [8, 32], strides = [1, 1]} : vector<16x32xf32> to vector<8x32xf32>
    %cst_24 = arith.constant 0.000000e+00 : f32
    %47 = vector.broadcast %cst_24 : f32 to vector<8x32xf32>
    %48 = arith.select %45, %46, %47 : vector<8x32xi1>, vector<8x32xf32>
    %49 = tpu.concatenate %43, %48 in 0 : vector<8x32xf32>, vector<8x32xf32> -> vector<16x32xf32>
    %c128 = arith.constant 128 : index
    %c0_25 = arith.constant 0 : index
    %50 = vector.load %arg1[%c128, %c0_25] : memref<168x32xf32, #tpu.memory_space<vmem>>, vector<32x16xf32>
    %cst_26 = arith.constant dense<0.000000e+00> : vector<16x16xf32>
    %51 = tpu.matmul %49, %50, %cst_26 {dimension_numbers = #tpu.dot_dimension_numbers<[1], [0], [0], [1], [0, 0, 1, 1], [], []>} : vector<16x32xf32>, vector<32x16xf32>, vector<16x16xf32> -> vector<16x16xf32>
    %52 = vector.extract_strided_slice %51 {offsets = [0, 0], sizes = [8, 16], strides = [1, 1]} : vector<16x16xf32> to vector<8x16xf32>
    %c160 = arith.constant 160 : index
    %c0_27 = arith.constant 0 : index
    %53 = vector.load %arg1[%c160, %c0_27] : memref<168x32xf32, #tpu.memory_space<vmem>>, vector<1x16xf32>
    %54 = vector.broadcast %53 : vector<1x16xf32> to vector<8x16xf32>
    %55 = arith.addf %52, %54 : vector<8x16xf32>
    %56 = vector.extract_strided_slice %51 {offsets = [8, 0], sizes = [8, 16], strides = [1, 1]} : vector<16x16xf32> to vector<8x16xf32>
    %cst_28 = arith.constant 0.000000e+00 : f32
    %57 = vector.broadcast %cst_28 : f32 to vector<8x84xf32>
    %58 = tpu.concatenate %55, %56, %20, %21, %34, %57 in 1 : vector<8x16xf32>, vector<8x16xf32>, vector<8x4xf32>, vector<8x4xf32>, vector<8x4xf32>, vector<8x84xf32> -> vector<8x128xf32>
    %c0_29 = arith.constant 0 : index
    %c0_30 = arith.constant 0 : index
    %59 = vector.load %arg2[%c0_29, %c0_30] : memref<8x128xf32, #tpu.memory_space<vmem>>, vector<8x128xf32>
    tpu.vector_store %arg2[%c0_29, %c0_30], %58 {strides = array<i32>} : memref<8x128xf32, #tpu.memory_space<vmem>>, vector<8x128xf32>,
    return
  }
}

</mosaic_0001>

<llo_original>
// kernel: tpu_custom_call.1
$region0: #{tpu_custom_call.1}
  #allocation0 [shape = 'u32[]', space=smem, size = 0x4, offset = 0x4, fixed_abs, tag = 'smem constant byte address 0x4 - core index']
  #allocation1 [shape = 'u32[144,128]{1,0:T(1,128)}', space=vmem, size = 0x12000, scoped, tag = 'internal scratch']
  %s0 = inlined_call_operand.vmem [shape: f32[16,16], index: 0, kind: input, shape index: {}]
  %s1 = inlined_call_operand.vmem [shape: f32[168,32], index: 1, kind: input, shape index: {}]
  %s2 = inlined_call_operand.hbm [shape: f32[8,128], index: 2, kind: output, shape index: {}]
  %s3 = sld [smem:[#allocation0]]
  $region18: #{tpu_custom_call.1} parent=0
    _
  %s5 = ssub.s32 1, %s3
  %s6 = scalar_select 0, %s5, %s3
  $region1: #{tpu_custom_call.1} parent=0
    #allocation2 [shape = 'u8[4096]{0}', space=vmem, size = 0x1000, scoped, tag = 'output window, operand 0, single buffered']
    #allocation3 [shape = 's32[1]{0}', space=sflag, size = 0x4, scoped, tag = 'scoped memory for tpu_custom_call.1']
    %7 = vsyncpa [#allocation3], 0
    // Predicated region
    $region2: #{tpu_custom_call.1} parent=1 // pred_check
      _
    $region3: #{tpu_custom_call.1} parent=1 // pred_check_branch
      %9 = sbr.rel (0) target = $region5
    $region4: #{tpu_custom_call.1} parent=1 // pred_region
      _
    $region5: #{tpu_custom_call.1} parent=1 // pred_fallthru
      _
    // Predicated region
    $region6: #{tpu_custom_call.1} parent=1 // pred_check
      _
    $region7: #{tpu_custom_call.1} parent=1 // pred_check_branch
      %11 = sbr.rel (0) target = $region9
    $region8: #{tpu_custom_call.1} parent=1 // pred_region
      _
    $region9: #{tpu_custom_call.1} parent=1 // pred_fallthru
      _
    %v12 = vld [vmem:[%s0] sm:$0xff]
    %v13 = vld [vmem:[%s0 + $0x8] sm:$0xff]
    %v14 = vld [vmem:[%s1] sm:$0xff]
    %v15 = vld [vmem:[%s1 + $0x8] sm:$0xff]
    %vm16 = vcmask 130048
    %v18 = vsel %vm16, %v12, 0
    %v21 = vsel %vm16, %v13, 0
    %23 = vmatprep.subr.mxu0 0.0
    %24 = vmatpush1.msra.mxu0 0.0
    %25 = vmatprep.subr.mxu0 0.0
    %26 = vmatpush1.msra.mxu0 0.0
    %27 = vmatprep.subr.mxu0 0.0
    %28 = vmatpush1.msra.mxu0 0.0
    %29 = vmatprep.subr.mxu0 0.0
    %30 = vmatpush1.msra.mxu0 0.0
    %31 = vmatprep.subr.mxu0 0.0
    %32 = vmatpush1.msra.mxu0 0.0
    %33 = vmatprep.subr.mxu0 0.0
    %34 = vmatpush1.msra.mxu0 0.0
    %35 = vmatprep.subr.mxu0 0.0
    %36 = vmatpush1.msra.mxu0 0.0
    %37 = vmatprep.subr.mxu0 0.0
    %38 = vmatpush1.msra.mxu0 0.0
    %39 = vmatprep.subr.mxu0 0.0
    %40 = vmatpush1.msra.mxu0 0.0
    %41 = vmatprep.subr.mxu0 0.0
    %42 = vmatpush1.msra.mxu0 0.0
    %43 = vmatprep.subr.mxu0 0.0
    %44 = vmatpush1.msra.mxu0 0.0
    %45 = vmatprep.subr.mxu0 0.0
    %46 = vmatpush1.msra.mxu0 0.0
    %47 = vmatprep.subr.mxu0 0.0
    %48 = vmatpush1.msra.mxu0 0.0
    %49 = vmatprep.subr.mxu0 0.0
    %50 = vmatpush1.msra.mxu0 0.0
    %51 = vmatprep.subr.mxu0 0.0
    %52 = vmatpush1.msra.mxu0 %v15
    %53 = vmatprep.subr.mxu0 0.0
    %54 = vmatpush1.msra.mxu0 %v14
    %55 = vmatprep.subr.mxu0 0.0
    %56 = vmatpush2.msra.mxu0 0.0
    %57 = vmatprep.subr.mxu0 0.0
    %58 = vmatpush2.msra.mxu0 0.0
    %59 = vmatprep.subr.mxu0 0.0
    %60 = vmatpush2.msra.mxu0 0.0
    %61 = vmatprep.subr.mxu0 0.0
    %62 = vmatpush2.msra.mxu0 0.0
    %63 = vmatprep.subr.mxu0 0.0
    %64 = vmatpush2.msra.mxu0 0.0
    %65 = vmatprep.subr.mxu0 0.0
    %66 = vmatpush2.msra.mxu0 0.0
    %67 = vmatprep.subr.mxu0 0.0
    %68 = vmatpush2.msra.mxu0 0.0
    %69 = vmatprep.subr.mxu0 0.0
    %70 = vmatpush2.msra.mxu0 0.0
    %71 = vmatprep.subr.mxu0 0.0
    %72 = vmatpush2.msra.mxu0 0.0
    %73 = vmatprep.subr.mxu0 0.0
    %74 = vmatpush2.msra.mxu0 0.0
    %75 = vmatprep.subr.mxu0 0.0
    %76 = vmatpush2.msra.mxu0 0.0
    %77 = vmatprep.subr.mxu0 0.0
    %78 = vmatpush2.msra.mxu0 0.0
    %79 = vmatprep.subr.mxu0 0.0
    %80 = vmatpush2.msra.mxu0 0.0
    %81 = vmatprep.subr.mxu0 0.0
    %82 = vmatpush2.msra.mxu0 0.0
    %83 = vmatprep.subr.mxu0 0.0
    %84 = vmatpush2.msra.mxu0 0.0
    %85 = vmatprep.subr.mxu0 0.0
    %86 = vmatpush2.msra.mxu0 0.0
    %87 = vmatprep.mubr.f32.mxu0 0.0
    %88 = vmatmul.mubr.f32.gmra.mxu0 %v18
    %v89 = vpop.f32.mrf.mxu0
    %v90 = vadd.f32 0.0, %v89
    %v91 = vpop.f32.mrf.mxu0
    %92 = vmatprep.mubr.f32.mxu0 0.0
    %93 = vmatmul.mubr.f32.gmra.mxu0 %v21
    %v94 = vpop.f32.mrf.mxu0
    %v95 = vadd.f32 0.0, %v94
    %v96 = vpop.f32.mrf.mxu0
    %97 = vdwg.mxu0
    %v98 = vld [vmem:[%s1 + $0x10] sm:$0x1]
    %v99 = vlaneseq
    %v100 = vshrl.u32 %v99, 7
    %v101 = vsub.s32 0, %v100
    %v102 = vrot.slane %v98, %v101
    %v103 = vadd.f32 %v90, %v102
    %v104 = vmax.f32 %v103, 0.0
    %vm105 = vcmp.gt.f32.partialorder %v103, 0.0
    %v106 = vsel %vm105, %v95, 0.0
    %v107 = vld [vmem:[%s1 + $0x18] sm:$0xff]
    %v108 = vld [vmem:[%s1 + $0x20] sm:$0xff]
    %v109 = vld [vmem:[%s1 + $0x28] sm:$0xff]
    %v110 = vld [vmem:[%s1 + $0x30] sm:$0xff]
    %vm111 = vcmask 261120
    %v113 = vsel %vm111, %v104, 0
    %v116 = vsel %vm111, %v106, 0
    %118 = vmatprep.subr.mxu0 0.0
    %119 = vmatpush1.msra.mxu0 0.0
    %120 = vmatprep.subr.mxu0 0.0
    %121 = vmatpush1.msra.mxu0 0.0
    %122 = vmatprep.subr.mxu0 0.0
    %123 = vmatpush1.msra.mxu0 0.0
    %124 = vmatprep.subr.mxu0 0.0
    %125 = vmatpush1.msra.mxu0 0.0
    %126 = vmatprep.subr.mxu0 0.0
    %127 = vmatpush1.msra.mxu0 0.0
    %128 = vmatprep.subr.mxu0 0.0
    %129 = vmatpush1.msra.mxu0 0.0
    %130 = vmatprep.subr.mxu0 0.0
    %131 = vmatpush1.msra.mxu0 0.0
    %132 = vmatprep.subr.mxu0 0.0
    %133 = vmatpush1.msra.mxu0 0.0
    %134 = vmatprep.subr.mxu0 0.0
    %135 = vmatpush1.msra.mxu0 0.0
    %136 = vmatprep.subr.mxu0 0.0
    %137 = vmatpush1.msra.mxu0 0.0
    %138 = vmatprep.subr.mxu0 0.0
    %139 = vmatpush1.msra.mxu0 0.0
    %140 = vmatprep.subr.mxu0 0.0
    %141 = vmatpush1.msra.mxu0 0.0
    %142 = vmatprep.subr.mxu0 0.0
    %143 = vmatpush1.msra.mxu0 %v110
    %144 = vmatprep.subr.mxu0 0.0
    %145 = vmatpush1.msra.mxu0 %v109
    %146 = vmatprep.subr.mxu0 0.0
    %147 = vmatpush1.msra.mxu0 %v108
    %148 = vmatprep.subr.mxu0 0.0
    %149 = vmatpush1.msra.mxu0 %v107
    %150 = vmatprep.subr.mxu0 0.0
    %151 = vmatpush2.msra.mxu0 0.0
    %152 = vmatprep.subr.mxu0 0.0
    %153 = vmatpush2.msra.mxu0 0.0
    %154 = vmatprep.subr.mxu0 0.0
    %155 = vmatpush2.msra.mxu0 0.0
    %156 = vmatprep.subr.mxu0 0.0
    %157 = vmatpush2.msra.mxu0 0.0
    %158 = vmatprep.subr.mxu0 0.0
    %159 = vmatpush2.msra.mxu0 0.0
    %160 = vmatprep.subr.mxu0 0.0
    %161 = vmatpush2.msra.mxu0 0.0
    %162 = vmatprep.subr.mxu0 0.0
    %163 = vmatpush2.msra.mxu0 0.0
    %164 = vmatprep.subr.mxu0 0.0
    %165 = vmatpush2.msra.mxu0 0.0
    %166 = vmatprep.subr.mxu0 0.0
    %167 = vmatpush2.msra.mxu0 0.0
    %168 = vmatprep.subr.mxu0 0.0
    %169 = vmatpush2.msra.mxu0 0.0
    %170 = vmatprep.subr.mxu0 0.0
    %171 = vmatpush2.msra.mxu0 0.0
    %172 = vmatprep.subr.mxu0 0.0
    %173 = vmatpush2.msra.mxu0 0.0
    %174 = vmatprep.subr.mxu0 0.0
    %175 = vmatpush2.msra.mxu0 0.0
    %176 = vmatprep.subr.mxu0 0.0
    %177 = vmatpush2.msra.mxu0 0.0
    %178 = vmatprep.subr.mxu0 0.0
    %179 = vmatpush2.msra.mxu0 0.0
    %180 = vmatprep.subr.mxu0 0.0
    %181 = vmatpush2.msra.mxu0 0.0
    %182 = vmatprep.mubr.f32.mxu0 0.0
    %183 = vmatmul.mubr.f32.gmra.mxu0 %v113
    %v184 = vpop.f32.mrf.mxu0
    %v185 = vadd.f32 0.0, %v184
    %v186 = vpop.f32.mrf.mxu0
    %187 = vmatprep.mubr.f32.mxu0 0.0
    %188 = vmatmul.mubr.f32.gmra.mxu0 %v116
    %v189 = vpop.f32.mrf.mxu0
    %v190 = vadd.f32 0.0, %v189
    %v191 = vpop.f32.mrf.mxu0
    %192 = vdwg.mxu0
    %v193 = vld [vmem:[%s1 + $0x38] sm:$0x1]
    %v194 = vlaneseq
    %v195 = vshrl.u32 %v194, 7
    %v196 = vsub.s32 0, %v195
    %v197 = vrot.slane %v193, %v196
    %v198 = vadd.f32 %v185, %v197
    %v199 = vld [vmem:[%s1 + $0x50] sm:$0xf]
    %vm200 = vcmask 31744
    %v202 = vsel %vm200, %v198, 0
    %vm204 = vcmask 1043456
    %v206 = vsel %vm204, %v199, 0
    %208 = vmatprep.subr.mxu0 0.0
    %209 = vmatpush1.msra.mxu0 0.0
    %210 = vmatprep.subr.mxu0 0.0
    %211 = vmatpush1.msra.mxu0 0.0
    %212 = vmatprep.subr.mxu0 0.0
    %213 = vmatpush1.msra.mxu0 0.0
    %214 = vmatprep.subr.mxu0 0.0
    %215 = vmatpush1.msra.mxu0 0.0
    %216 = vmatprep.subr.mxu0 0.0
    %217 = vmatpush1.msra.mxu0 0.0
    %218 = vmatprep.subr.mxu0 0.0
    %219 = vmatpush1.msra.mxu0 0.0
    %220 = vmatprep.subr.mxu0 0.0
    %221 = vmatpush1.msra.mxu0 0.0
    %222 = vmatprep.subr.mxu0 0.0
    %223 = vmatpush1.msra.mxu0 0.0
    %224 = vmatprep.subr.mxu0 0.0
    %225 = vmatpush1.msra.mxu0 0.0
    %226 = vmatprep.subr.mxu0 0.0
    %227 = vmatpush1.msra.mxu0 0.0
    %228 = vmatprep.subr.mxu0 0.0
    %229 = vmatpush1.msra.mxu0 0.0
    %230 = vmatprep.subr.mxu0 0.0
    %231 = vmatpush1.msra.mxu0 0.0
    %232 = vmatprep.subr.mxu0 0.0
    %233 = vmatpush1.msra.mxu0 0.0
    %234 = vmatprep.subr.mxu0 0.0
    %235 = vmatpush1.msra.mxu0 0.0
    %236 = vmatprep.subr.mxu0 0.0
    %237 = vmatpush1.msra.mxu0 0.0
    %238 = vmatprep.subr.mxu0 0.0
    %239 = vmatpush1.msra.mxu0 %v206
    %240 = vmatprep.subr.mxu0 0.0
    %241 = vmatpush2.msra.mxu0 0.0
    %242 = vmatprep.subr.mxu0 0.0
    %243 = vmatpush2.msra.mxu0 0.0
    %244 = vmatprep.subr.mxu0 0.0
    %245 = vmatpush2.msra.mxu0 0.0
    %246 = vmatprep.subr.mxu0 0.0
    %247 = vmatpush2.msra.mxu0 0.0
    %248 = vmatprep.subr.mxu0 0.0
    %249 = vmatpush2.msra.mxu0 0.0
    %250 = vmatprep.subr.mxu0 0.0
    %251 = vmatpush2.msra.mxu0 0.0
    %252 = vmatprep.subr.mxu0 0.0
    %253 = vmatpush2.msra.mxu0 0.0
    %254 = vmatprep.subr.mxu0 0.0
    %255 = vmatpush2.msra.mxu0 0.0
    %256 = vmatprep.subr.mxu0 0.0
    %257 = vmatpush2.msra.mxu0 0.0
    %258 = vmatprep.subr.mxu0 0.0
    %259 = vmatpush2.msra.mxu0 0.0
    %260 = vmatprep.subr.mxu0 0.0
    %261 = vmatpush2.msra.mxu0 0.0
    %262 = vmatprep.subr.mxu0 0.0
    %263 = vmatpush2.msra.mxu0 0.0
    %264 = vmatprep.subr.mxu0 0.0
    %265 = vmatpush2.msra.mxu0 0.0
    %266 = vmatprep.subr.mxu0 0.0
    %267 = vmatpush2.msra.mxu0 0.0
    %268 = vmatprep.subr.mxu0 0.0
    %269 = vmatpush2.msra.mxu0 0.0
    %270 = vmatprep.subr.mxu0 0.0
    %271 = vmatpush2.msra.mxu0 0.0
    %272 = vmatprep.mubr.f32.mxu0 0.0
    %273 = vmatmul.mubr.f32.gmra.mxu0 %v202
    %v274 = vpop.f32.mrf.mxu0
    %v275 = vadd.f32 0.0, %v274
    %v276 = vpop.f32.mrf.mxu0
    %277 = vdwg.mxu0
    %v278 = vld [vmem:[%s1 + $0x58] sm:$0xf]
    %v280 = vsel %vm204, %v278, 0
    %282 = vmatprep.subr.mxu0 0.0
    %283 = vmatpush1.msra.mxu0 0.0
    %284 = vmatprep.subr.mxu0 0.0
    %285 = vmatpush1.msra.mxu0 0.0
    %286 = vmatprep.subr.mxu0 0.0
    %287 = vmatpush1.msra.mxu0 0.0
    %288 = vmatprep.subr.mxu0 0.0
    %289 = vmatpush1.msra.mxu0 0.0
    %290 = vmatprep.subr.mxu0 0.0
    %291 = vmatpush1.msra.mxu0 0.0
    %292 = vmatprep.subr.mxu0 0.0
    %293 = vmatpush1.msra.mxu0 0.0
    %294 = vmatprep.subr.mxu0 0.0
    %295 = vmatpush1.msra.mxu0 0.0
    %296 = vmatprep.subr.mxu0 0.0
    %297 = vmatpush1.msra.mxu0 0.0
    %298 = vmatprep.subr.mxu0 0.0
    %299 = vmatpush1.msra.mxu0 0.0
    %300 = vmatprep.subr.mxu0 0.0
    %301 = vmatpush1.msra.mxu0 0.0
    %302 = vmatprep.subr.mxu0 0.0
    %303 = vmatpush1.msra.mxu0 0.0
    %304 = vmatprep.subr.mxu0 0.0
    %305 = vmatpush1.msra.mxu0 0.0
    %306 = vmatprep.subr.mxu0 0.0
    %307 = vmatpush1.msra.mxu0 0.0
    %308 = vmatprep.subr.mxu0 0.0
    %309 = vmatpush1.msra.mxu0 0.0
    %310 = vmatprep.subr.mxu0 0.0
    %311 = vmatpush1.msra.mxu0 0.0
    %312 = vmatprep.subr.mxu0 0.0
    %313 = vmatpush1.msra.mxu0 %v280
    %314 = vmatprep.subr.mxu0 0.0
    %315 = vmatpush2.msra.mxu0 0.0
    %316 = vmatprep.subr.mxu0 0.0
    %317 = vmatpush2.msra.mxu0 0.0
    %318 = vmatprep.subr.mxu0 0.0
    %319 = vmatpush2.msra.mxu0 0.0
    %320 = vmatprep.subr.mxu0 0.0
    %321 = vmatpush2.msra.mxu0 0.0
    %322 = vmatprep.subr.mxu0 0.0
    %323 = vmatpush2.msra.mxu0 0.0
    %324 = vmatprep.subr.mxu0 0.0
    %325 = vmatpush2.msra.mxu0 0.0
    %326 = vmatprep.subr.mxu0 0.0
    %327 = vmatpush2.msra.mxu0 0.0
    %328 = vmatprep.subr.mxu0 0.0
    %329 = vmatpush2.msra.mxu0 0.0
    %330 = vmatprep.subr.mxu0 0.0
    %331 = vmatpush2.msra.mxu0 0.0
    %332 = vmatprep.subr.mxu0 0.0
    %333 = vmatpush2.msra.mxu0 0.0
    %334 = vmatprep.subr.mxu0 0.0
    %335 = vmatpush2.msra.mxu0 0.0
    %336 = vmatprep.subr.mxu0 0.0
    %337 = vmatpush2.msra.mxu0 0.0
    %338 = vmatprep.subr.mxu0 0.0
    %339 = vmatpush2.msra.mxu0 0.0
    %340 = vmatprep.subr.mxu0 0.0
    %341 = vmatpush2.msra.mxu0 0.0
    %342 = vmatprep.subr.mxu0 0.0
    %343 = vmatpush2.msra.mxu0 0.0
    %344 = vmatprep.subr.mxu0 0.0
    %345 = vmatpush2.msra.mxu0 0.0
    %346 = vmatprep.mubr.f32.mxu0 0.0
    %347 = vmatmul.mubr.f32.gmra.mxu0 %v202
    %v348 = vpop.f32.mrf.mxu0
    %v349 = vadd.f32 0.0, %v348
    %v350 = vpop.f32.mrf.mxu0
    %351 = vdwg.mxu0
    %v352 = vmul.f32 %v275, %v349
    %v353 = vld [vmem:[%s1 + $0x40] sm:$0x1]
    %v354 = vld [vmem:[%s1 + $0x48] sm:$0xf]
    %v356 = vsel %vm204, %v354, 0
    %358 = vmatprep.subr.mxu0 0.0
    %359 = vmatpush1.msra.mxu0 0.0
    %360 = vmatprep.subr.mxu0 0.0
    %361 = vmatpush1.msra.mxu0 0.0
    %362 = vmatprep.subr.mxu0 0.0
    %363 = vmatpush1.msra.mxu0 0.0
    %364 = vmatprep.subr.mxu0 0.0
    %365 = vmatpush1.msra.mxu0 0.0
    %366 = vmatprep.subr.mxu0 0.0
    %367 = vmatpush1.msra.mxu0 0.0
    %368 = vmatprep.subr.mxu0 0.0
    %369 = vmatpush1.msra.mxu0 0.0
    %370 = vmatprep.subr.mxu0 0.0
    %371 = vmatpush1.msra.mxu0 0.0
    %372 = vmatprep.subr.mxu0 0.0
    %373 = vmatpush1.msra.mxu0 0.0
    %374 = vmatprep.subr.mxu0 0.0
    %375 = vmatpush1.msra.mxu0 0.0
    %376 = vmatprep.subr.mxu0 0.0
    %377 = vmatpush1.msra.mxu0 0.0
    %378 = vmatprep.subr.mxu0 0.0
    %379 = vmatpush1.msra.mxu0 0.0
    %380 = vmatprep.subr.mxu0 0.0
    %381 = vmatpush1.msra.mxu0 0.0
    %382 = vmatprep.subr.mxu0 0.0
    %383 = vmatpush1.msra.mxu0 0.0
    %384 = vmatprep.subr.mxu0 0.0
    %385 = vmatpush1.msra.mxu0 0.0
    %386 = vmatprep.subr.mxu0 0.0
    %387 = vmatpush1.msra.mxu0 0.0
    %388 = vmatprep.subr.mxu0 0.0
    %389 = vmatpush1.msra.mxu0 %v356
    %390 = vmatprep.subr.mxu0 0.0
    %391 = vmatpush2.msra.mxu0 0.0
    %392 = vmatprep.subr.mxu0 0.0
    %393 = vmatpush2.msra.mxu0 0.0
    %394 = vmatprep.subr.mxu0 0.0
    %395 = vmatpush2.msra.mxu0 0.0
    %396 = vmatprep.subr.mxu0 0.0
    %397 = vmatpush2.msra.mxu0 0.0
    %398 = vmatprep.subr.mxu0 0.0
    %399 = vmatpush2.msra.mxu0 0.0
    %400 = vmatprep.subr.mxu0 0.0
    %401 = vmatpush2.msra.mxu0 0.0
    %402 = vmatprep.subr.mxu0 0.0
    %403 = vmatpush2.msra.mxu0 0.0
    %404 = vmatprep.subr.mxu0 0.0
    %405 = vmatpush2.msra.mxu0 0.0
    %406 = vmatprep.subr.mxu0 0.0
    %407 = vmatpush2.msra.mxu0 0.0
    %408 = vmatprep.subr.mxu0 0.0
    %409 = vmatpush2.msra.mxu0 0.0
    %410 = vmatprep.subr.mxu0 0.0
    %411 = vmatpush2.msra.mxu0 0.0
    %412 = vmatprep.subr.mxu0 0.0
    %413 = vmatpush2.msra.mxu0 0.0
    %414 = vmatprep.subr.mxu0 0.0
    %415 = vmatpush2.msra.mxu0 0.0
    %416 = vmatprep.subr.mxu0 0.0
    %417 = vmatpush2.msra.mxu0 0.0
    %418 = vmatprep.subr.mxu0 0.0
    %419 = vmatpush2.msra.mxu0 0.0
    %420 = vmatprep.subr.mxu0 0.0
    %421 = vmatpush2.msra.mxu0 0.0
    %422 = vmatprep.mubr.f32.mxu0 0.0
    %423 = vmatmul.mubr.f32.gmra.mxu0 %v202
    %v424 = vpop.f32.mrf.mxu0
    %v425 = vadd.f32 0.0, %v424
    %v426 = vpop.f32.mrf.mxu0
    %427 = vdwg.mxu0
    %v428 = vlaneseq
    %v429 = vshrl.u32 %v428, 7
    %v430 = vsub.s32 0, %v429
    %v431 = vrot.slane %v353, %v430
    %v432 = vadd.f32 %v431, %v425
    %v433 = vld [vmem:[%s1 + $0x60] sm:$0xff]
    %v434 = vld [vmem:[%s1 + $0x68] sm:$0xff]
    %v436 = vsel %vm16, %v352, 0
    %438 = vmatprep.subr.mxu0 0.0
    %439 = vmatpush1.msra.mxu0 0.0
    %440 = vmatprep.subr.mxu0 0.0
    %441 = vmatpush1.msra.mxu0 0.0
    %442 = vmatprep.subr.mxu0 0.0
    %443 = vmatpush1.msra.mxu0 0.0
    %444 = vmatprep.subr.mxu0 0.0
    %445 = vmatpush1.msra.mxu0 0.0
    %446 = vmatprep.subr.mxu0 0.0
    %447 = vmatpush1.msra.mxu0 0.0
    %448 = vmatprep.subr.mxu0 0.0
    %449 = vmatpush1.msra.mxu0 0.0
    %450 = vmatprep.subr.mxu0 0.0
    %451 = vmatpush1.msra.mxu0 0.0
    %452 = vmatprep.subr.mxu0 0.0
    %453 = vmatpush1.msra.mxu0 0.0
    %454 = vmatprep.subr.mxu0 0.0
    %455 = vmatpush1.msra.mxu0 0.0
    %456 = vmatprep.subr.mxu0 0.0
    %457 = vmatpush1.msra.mxu0 0.0
    %458 = vmatprep.subr.mxu0 0.0
    %459 = vmatpush1.msra.mxu0 0.0
    %460 = vmatprep.subr.mxu0 0.0
    %461 = vmatpush1.msra.mxu0 0.0
    %462 = vmatprep.subr.mxu0 0.0
    %463 = vmatpush1.msra.mxu0 0.0
    %464 = vmatprep.subr.mxu0 0.0
    %465 = vmatpush1.msra.mxu0 0.0
    %466 = vmatprep.subr.mxu0 0.0
    %467 = vmatpush1.msra.mxu0 %v434
    %468 = vmatprep.subr.mxu0 0.0
    %469 = vmatpush1.msra.mxu0 %v433
    %470 = vmatprep.subr.mxu0 0.0
    %471 = vmatpush2.msra.mxu0 0.0
    %472 = vmatprep.subr.mxu0 0.0
    %473 = vmatpush2.msra.mxu0 0.0
    %474 = vmatprep.subr.mxu0 0.0
    %475 = vmatpush2.msra.mxu0 0.0
    %476 = vmatprep.subr.mxu0 0.0
    %477 = vmatpush2.msra.mxu0 0.0
    %478 = vmatprep.subr.mxu0 0.0
    %479 = vmatpush2.msra.mxu0 0.0
    %480 = vmatprep.subr.mxu0 0.0
    %481 = vmatpush2.msra.mxu0 0.0
    %482 = vmatprep.subr.mxu0 0.0
    %483 = vmatpush2.msra.mxu0 0.0
    %484 = vmatprep.subr.mxu0 0.0
    %485 = vmatpush2.msra.mxu0 0.0
    %486 = vmatprep.subr.mxu0 0.0
    %487 = vmatpush2.msra.mxu0 0.0
    %488 = vmatprep.subr.mxu0 0.0
    %489 = vmatpush2.msra.mxu0 0.0
    %490 = vmatprep.subr.mxu0 0.0
    %491 = vmatpush2.msra.mxu0 0.0
    %492 = vmatprep.subr.mxu0 0.0
    %493 = vmatpush2.msra.mxu0 0.0
    %494 = vmatprep.subr.mxu0 0.0
    %495 = vmatpush2.msra.mxu0 0.0
    %496 = vmatprep.subr.mxu0 0.0
    %497 = vmatpush2.msra.mxu0 0.0
    %498 = vmatprep.subr.mxu0 0.0
    %499 = vmatpush2.msra.mxu0 0.0
    %500 = vmatprep.subr.mxu0 0.0
    %501 = vmatpush2.msra.mxu0 0.0
    %502 = vmatprep.mubr.f32.mxu0 0.0
    %503 = vmatmul.mubr.f32.gmra.mxu0 %v436
    %v504 = vpop.f32.mrf.mxu0
    %v505 = vadd.f32 0.0, %v504
    %v506 = vpop.f32.mrf.mxu0
    %507 = vdwg.mxu0
    %v508 = vadd.f32 %v432, %v505
    %v509 = vld [vmem:[%s1 + $0x70] sm:$0xf]
    %v511 = vsel %vm200, %v508, 0
    %v514 = vsel %vm204, %v509, 0
    %516 = vmatprep.subr.mxu0 0.0
    %517 = vmatpush1.msra.mxu0 0.0
    %518 = vmatprep.subr.mxu0 0.0
    %519 = vmatpush1.msra.mxu0 0.0
    %520 = vmatprep.subr.mxu0 0.0
    %521 = vmatpush1.msra.mxu0 0.0
    %522 = vmatprep.subr.mxu0 0.0
    %523 = vmatpush1.msra.mxu0 0.0
    %524 = vmatprep.subr.mxu0 0.0
    %525 = vmatpush1.msra.mxu0 0.0
    %526 = vmatprep.subr.mxu0 0.0
    %527 = vmatpush1.msra.mxu0 0.0
    %528 = vmatprep.subr.mxu0 0.0
    %529 = vmatpush1.msra.mxu0 0.0
    %530 = vmatprep.subr.mxu0 0.0
    %531 = vmatpush1.msra.mxu0 0.0
    %532 = vmatprep.subr.mxu0 0.0
    %533 = vmatpush1.msra.mxu0 0.0
    %534 = vmatprep.subr.mxu0 0.0
    %535 = vmatpush1.msra.mxu0 0.0
    %536 = vmatprep.subr.mxu0 0.0
    %537 = vmatpush1.msra.mxu0 0.0
    %538 = vmatprep.subr.mxu0 0.0
    %539 = vmatpush1.msra.mxu0 0.0
    %540 = vmatprep.subr.mxu0 0.0
    %541 = vmatpush1.msra.mxu0 0.0
    %542 = vmatprep.subr.mxu0 0.0
    %543 = vmatpush1.msra.mxu0 0.0
    %544 = vmatprep.subr.mxu0 0.0
    %545 = vmatpush1.msra.mxu0 0.0
    %546 = vmatprep.subr.mxu0 0.0
    %547 = vmatpush1.msra.mxu0 %v514
    %548 = vmatprep.subr.mxu0 0.0
    %549 = vmatpush2.msra.mxu0 0.0
    %550 = vmatprep.subr.mxu0 0.0
    %551 = vmatpush2.msra.mxu0 0.0
    %552 = vmatprep.subr.mxu0 0.0
    %553 = vmatpush2.msra.mxu0 0.0
    %554 = vmatprep.subr.mxu0 0.0
    %555 = vmatpush2.msra.mxu0 0.0
    %556 = vmatprep.subr.mxu0 0.0
    %557 = vmatpush2.msra.mxu0 0.0
    %558 = vmatprep.subr.mxu0 0.0
    %559 = vmatpush2.msra.mxu0 0.0
    %560 = vmatprep.subr.mxu0 0.0
    %561 = vmatpush2.msra.mxu0 0.0
    %562 = vmatprep.subr.mxu0 0.0
    %563 = vmatpush2.msra.mxu0 0.0
    %564 = vmatprep.subr.mxu0 0.0
    %565 = vmatpush2.msra.mxu0 0.0
    %566 = vmatprep.subr.mxu0 0.0
    %567 = vmatpush2.msra.mxu0 0.0
    %568 = vmatprep.subr.mxu0 0.0
    %569 = vmatpush2.msra.mxu0 0.0
    %570 = vmatprep.subr.mxu0 0.0
    %571 = vmatpush2.msra.mxu0 0.0
    %572 = vmatprep.subr.mxu0 0.0
    %573 = vmatpush2.msra.mxu0 0.0
    %574 = vmatprep.subr.mxu0 0.0
    %575 = vmatpush2.msra.mxu0 0.0
    %576 = vmatprep.subr.mxu0 0.0
    %577 = vmatpush2.msra.mxu0 0.0
    %578 = vmatprep.subr.mxu0 0.0
    %579 = vmatpush2.msra.mxu0 0.0
    %580 = vmatprep.mubr.f32.mxu0 0.0
    %581 = vmatmul.mubr.f32.gmra.mxu0 %v202
    %v582 = vpop.f32.mrf.mxu0
    %v583 = vadd.f32 0.0, %v582
    %v584 = vpop.f32.mrf.mxu0
    %585 = vmatprep.mubr.f32.mxu0 0.0
    %586 = vmatmul.mubr.f32.gmra.mxu0 %v511
    %v587 = vpop.f32.mrf.mxu0
    %v588 = vadd.f32 0.0, %v587
    %v589 = vpop.f32.mrf.mxu0
    %590 = vdwg.mxu0
    %v591 = vld [vmem:[%s1 + $0x78] sm:$0x1]
    %v592 = vlaneseq
    %v593 = vshrl.u32 %v592, 7
    %v594 = vsub.s32 0, %v593
    %v595 = vrot.slane %v591, %v594
    %v596 = vadd.f32 %v583, %v595
    %v597 = vmax.f32 %v596, 0.0
    %vm598 = vcmp.gt.f32.partialorder %v596, 0.0
    %v599 = vsel %vm598, %v588, 0.0
    %v600 = vld [vmem:[%s1 + $0x80] sm:$0xff]
    %v601 = vld [vmem:[%s1 + $0x88] sm:$0xff]
    %v602 = vld [vmem:[%s1 + $0x90] sm:$0xff]
    %v603 = vld [vmem:[%s1 + $0x98] sm:$0xff]
    %v605 = vsel %vm111, %v597, 0
    %v608 = vsel %vm111, %v599, 0
    %610 = vmatprep.subr.mxu0 0.0
    %611 = vmatpush1.msra.mxu0 0.0
    %612 = vmatprep.subr.mxu0 0.0
    %613 = vmatpush1.msra.mxu0 0.0
    %614 = vmatprep.subr.mxu0 0.0
    %615 = vmatpush1.msra.mxu0 0.0
    %616 = vmatprep.subr.mxu0 0.0
    %617 = vmatpush1.msra.mxu0 0.0
    %618 = vmatprep.subr.mxu0 0.0
    %619 = vmatpush1.msra.mxu0 0.0
    %620 = vmatprep.subr.mxu0 0.0
    %621 = vmatpush1.msra.mxu0 0.0
    %622 = vmatprep.subr.mxu0 0.0
    %623 = vmatpush1.msra.mxu0 0.0
    %624 = vmatprep.subr.mxu0 0.0
    %625 = vmatpush1.msra.mxu0 0.0
    %626 = vmatprep.subr.mxu0 0.0
    %627 = vmatpush1.msra.mxu0 0.0
    %628 = vmatprep.subr.mxu0 0.0
    %629 = vmatpush1.msra.mxu0 0.0
    %630 = vmatprep.subr.mxu0 0.0
    %631 = vmatpush1.msra.mxu0 0.0
    %632 = vmatprep.subr.mxu0 0.0
    %633 = vmatpush1.msra.mxu0 0.0
    %634 = vmatprep.subr.mxu0 0.0
    %635 = vmatpush1.msra.mxu0 %v603
    %636 = vmatprep.subr.mxu0 0.0
    %637 = vmatpush1.msra.mxu0 %v602
    %638 = vmatprep.subr.mxu0 0.0
    %639 = vmatpush1.msra.mxu0 %v601
    %640 = vmatprep.subr.mxu0 0.0
    %641 = vmatpush1.msra.mxu0 %v600
    %642 = vmatprep.subr.mxu0 0.0
    %643 = vmatpush2.msra.mxu0 0.0
    %644 = vmatprep.subr.mxu0 0.0
    %645 = vmatpush2.msra.mxu0 0.0
    %646 = vmatprep.subr.mxu0 0.0
    %647 = vmatpush2.msra.mxu0 0.0
    %648 = vmatprep.subr.mxu0 0.0
    %649 = vmatpush2.msra.mxu0 0.0
    %650 = vmatprep.subr.mxu0 0.0
    %651 = vmatpush2.msra.mxu0 0.0
    %652 = vmatprep.subr.mxu0 0.0
    %653 = vmatpush2.msra.mxu0 0.0
    %654 = vmatprep.subr.mxu0 0.0
    %655 = vmatpush2.msra.mxu0 0.0
    %656 = vmatprep.subr.mxu0 0.0
    %657 = vmatpush2.msra.mxu0 0.0
    %658 = vmatprep.subr.mxu0 0.0
    %659 = vmatpush2.msra.mxu0 0.0
    %660 = vmatprep.subr.mxu0 0.0
    %661 = vmatpush2.msra.mxu0 0.0
    %662 = vmatprep.subr.mxu0 0.0
    %663 = vmatpush2.msra.mxu0 0.0
    %664 = vmatprep.subr.mxu0 0.0
    %665 = vmatpush2.msra.mxu0 0.0
    %666 = vmatprep.subr.mxu0 0.0
    %667 = vmatpush2.msra.mxu0 0.0
    %668 = vmatprep.subr.mxu0 0.0
    %669 = vmatpush2.msra.mxu0 0.0
    %670 = vmatprep.subr.mxu0 0.0
    %671 = vmatpush2.msra.mxu0 0.0
    %672 = vmatprep.subr.mxu0 0.0
    %673 = vmatpush2.msra.mxu0 0.0
    %674 = vmatprep.mubr.f32.mxu0 0.0
    %675 = vmatmul.mubr.f32.gmra.mxu0 %v605
    %v676 = vpop.f32.mrf.mxu0
    %v677 = vadd.f32 0.0, %v676
    %v678 = vpop.f32.mrf.mxu0
    %679 = vmatprep.mubr.f32.mxu0 0.0
    %680 = vmatmul.mubr.f32.gmra.mxu0 %v608
    %v681 = vpop.f32.mrf.mxu0
    %v682 = vadd.f32 0.0, %v681
    %v683 = vpop.f32.mrf.mxu0
    %684 = vdwg.mxu0
    %v685 = vld [vmem:[%s1 + $0xa0] sm:$0x1]
    %v686 = vlaneseq
    %v687 = vshrl.u32 %v686, 7
    %v688 = vsub.s32 0, %v687
    %v689 = vrot.slane %v685, %v688
    %v690 = vadd.f32 %v677, %v689
    %692 = vrot.lane.b32.xlu0 %v682, 16
    %v693 = vpop.permute.xlu0 %692
    %695 = vrot.lane.b32.xlu0 %v198, 32
    %v696 = vpop.permute.xlu0 %695
    %699 = vrot.lane.b32.xlu0 %v190, 36
    %v700 = vpop.permute.xlu0 %699
    %702 = vrot.lane.b32.xlu0 %v508, 40
    %v703 = vpop.permute.xlu0 %702
    %v705 = vsel %vm16, %v690, %v693
    %v706 = vsel %vm111, %v705, %v696
    %vm707 = vcmask 293888
    %v708 = vsel %vm707, %v706, %v700
    %vm709 = vcmask 326656
    %v710 = vsel %vm709, %v708, %v703
    %vm711 = vcmask 359424
    %v712 = vsel %vm711, %v710, 0.0
    %713 = vst [vmem:[#allocation2] sm:$0xff] %v712
    // Predicated region
    $region10: #{tpu_custom_call.1} parent=1 // pred_check
      _
    $region11: #{tpu_custom_call.1} parent=1 // pred_check_branch
      %715 = sbr.rel (0) target = $region13
    $region12: #{tpu_custom_call.1} parent=1 // pred_region
      %s717 = ssub.s32 128, 128
      %718 = vsyncadd [#allocation3], %s717
      %s720 = sshll.u32 [#allocation2], 4
      %s721 = int_to_ptr.vmem [resolvable:$true] %s720
      %723 = dma.vmem_to_hbm [thread:$0]  %s721, 128, %s2, [#allocation3]
    $region13: #{tpu_custom_call.1} parent=1 // pred_fallthru
      _
    // Predicated region
    $region14: #{tpu_custom_call.1} parent=1 // pred_check
      _
    $region15: #{tpu_custom_call.1} parent=1 // pred_check_branch
      %725 = sbr.rel (0) target = $region17
    $region16: #{tpu_custom_call.1} parent=1 // pred_region
      %726 = dma.done [#allocation3], 128
    $region17: #{tpu_custom_call.1} parent=1 // pred_fallthru
      _
    %727 = vsyncpa [#allocation3], 1

</llo_original>
